<compile_context>
chip_gen: v6e
topology: v6e:2x2x1
jax: 0.10.0
libtpu: 0.0.40
codegen_flags: <defaults>
</compile_context>

<pallas_src>
import functools

import jax
import jax.numpy as jnp
from jax import lax
from jax.experimental import pallas as pl
from jax.experimental.pallas import tpu as pltpu


def _round_up(x, m):
    return ((x + m - 1) // m) * m


def _head_kernel(emb_ref, pb1_ref, w1e_ref, w2_ref, b2_ref, w3r_ref, b3_ref,
                 out_ref):
    # emb_ref: (TL, D) f32, pb1_ref: (1, H1) f32 (= prob*w1p + b1 for this batch)
    x = emb_ref[...].astype(jnp.bfloat16)                      # (TL, D)

    # Linear(D+1, 256): cat([x, p]) @ W1 + b1 == x @ W1e + (p * w1p + b1)
    h1 = jnp.dot(x, w1e_ref[...], preferred_element_type=jnp.float32)
    h1 = jnp.maximum(h1 + pb1_ref[...], 0.0)                   # ReLU (Dropout = id)

    # Linear(256, 128) + ReLU
    h2 = jnp.dot(h1.astype(jnp.bfloat16), w2_ref[...],
                 preferred_element_type=jnp.float32)
    h2 = jnp.maximum(h2 + b2_ref[...], 0.0)

    # Linear(128, 1), computed as (1,H2) x (TL,H2)^T -> (1,TL): lane-dense output.
    o = lax.dot_general(w3r_ref[...], h2.astype(jnp.bfloat16),
                        dimension_numbers=(((1,), (1,)), ((), ())),
                        preferred_element_type=jnp.float32)    # (1, TL)
    o = o + b3_ref[...]

    out_ref[...] = o.astype(out_ref.dtype)                     # (1, TL) unmasked store


@functools.partial(jax.jit, static_argnames=("tl",))
def concat_seg_head(emb, prob, params, *, tl=512):
    """emb: (B, L, D) f32, prob: (B,) f32 -> (B, L) f32."""
    B, L, D = emb.shape
    w1e, w1p, b1, w2, b2, w3, b3 = params
    H1 = w1e.shape[1]     # 256
    H2 = w2.shape[1]      # 128

    # Row tile along L (sublane axis of the emb tile; lane axis of the output).
    tl_eff = min(tl, _round_up(L, 8))
    l_pad = _round_up(L, tl_eff)
    if l_pad != L:
        # TODO(synk): tail-tile masking would avoid this HBM pad copy; only hit
        # when L is not a multiple of the tile.
        emb = jnp.pad(emb, ((0, 0), (0, l_pad - L), (0, 0)))
    n_j = l_pad // tl_eff

    # Fold prob into layer-1 bias: (B, 1, H1) table, indexed per batch.
    pb1 = (prob[:, None] * w1p + b1).reshape(B, 1, H1).astype(jnp.float32)

    # bf16 weights for the MXU (f32 accumulation in-kernel).
    w1e_b = w1e.astype(jnp.bfloat16)                 # (D, H1)
    w2_b = w2.astype(jnp.bfloat16)                   # (H1, H2)
    w3r_b = w3.reshape(1, H2).astype(jnp.bfloat16)   # (1, H2)  (row form of (H2,1))

    out4 = pl.pallas_call(
        _head_kernel,
        out_shape=jax.ShapeDtypeStruct((B, n_j, 1, tl_eff), jnp.float32),
        grid_spec=pltpu.PrefetchScalarGridSpec(
            num_scalar_prefetch=0,
            grid=(B, n_j),
            in_specs=[
                pl.BlockSpec((None, tl_eff, D), lambda b, j: (b, j, 0)),  # emb tile
                pl.BlockSpec((None, 1, H1), lambda b, j: (b, 0, 0)),      # prob*w1p+b1
                pl.BlockSpec((D, H1), lambda b, j: (0, 0)),               # W1 (emb part)
                pl.BlockSpec((H1, H2), lambda b, j: (0, 0)),              # W2
                pl.BlockSpec((1, H2), lambda b, j: (0, 0)),               # b2
                pl.BlockSpec((1, H2), lambda b, j: (0, 0)),               # W3 as row
                pl.BlockSpec((1, 1), lambda b, j: (0, 0)),                # b3
            ],
            out_specs=pl.BlockSpec((None, None, 1, tl_eff),
                                   lambda b, j: (b, j, 0, 0)),
        ),
        compiler_params=pltpu.CompilerParams(
            dimension_semantics=("parallel", "parallel")),
    )(emb, pb1, w1e_b, w2_b, b2, w3r_b, b3)

    return out4.reshape(B, l_pad)[:, :L]


def init_params(key, embed_dim):
    """Deterministic parameter init matching nn.Linear shapes (f32)."""
    k = jax.random.split(key, 6)
    d_in = embed_dim + 1
    s1 = 1.0 / jnp.sqrt(d_in)
    w1 = jax.random.uniform(k[0], (d_in, 256), jnp.float32, -s1, s1)
    b1 = jax.random.uniform(k[1], (1, 256), jnp.float32, -s1, s1)
    w2 = jax.random.uniform(k[2], (256, 128), jnp.float32, -1.0 / 16.0, 1.0 / 16.0)
    b2 = jax.random.uniform(k[3], (1, 128), jnp.float32, -1.0 / 16.0, 1.0 / 16.0)
    s3 = 1.0 / jnp.sqrt(128.0)
    w3 = jax.random.uniform(k[4], (128, 1), jnp.float32, -s3, s3)
    b3 = jax.random.uniform(k[5], (1, 1), jnp.float32, -s3, s3)
    w1e = w1[:embed_dim, :]          # (D, 256)
    w1p = w1[embed_dim:, :]          # (1, 256)
    return (w1e, w1p, b1, w2, b2, w3, b3)


def reference(emb, prob, params):
    """Pure-JAX f32 reference (eval-mode: dropout = identity)."""
    w1e, w1p, b1, w2, b2, w3, b3 = params
    B, L, D = emb.shape
    x = emb.reshape(-1, D)
    p = jnp.repeat(prob[:, None], L, axis=1).reshape(-1, 1)
    h1 = jnp.maximum(x @ w1e + p * w1p + b1, 0.0)
    h2 = jnp.maximum(h1 @ w2 + b2, 0.0)
    return (h2 @ w3 + b3).reshape(B, L)


if __name__ == "__main__":
    key = jax.random.PRNGKey(0)
    k_emb, k_prob, k_param, k_emb2, k_prob2, k_param2 = jax.random.split(key, 6)

    # Small case (single tile per batch, tl_eff == L).
    B, L, D = 2, 8, 32
    emb = jax.random.normal(k_emb, (B, L, D), jnp.float32)
    prob = jax.random.uniform(k_prob, (B,), jnp.float32)
    params = init_params(k_param, D)

    out = concat_seg_head(emb, prob, params)
    out = jax.block_until_ready(out)
    ref = reference(emb, prob, params)
    assert out.shape == (B, L)
    assert jnp.allclose(out, ref, atol=3e-2, rtol=3e-2), \
        float(jnp.max(jnp.abs(out - ref)))

    # Larger case exercising multi-tile grid, batch axis, and L padding.
    B2, L2, D2 = 2, 200, 64
    emb2 = jax.random.normal(k_emb2, (B2, L2, D2), jnp.float32)
    prob2 = jax.random.uniform(k_prob2, (B2,), jnp.float32)
    params2 = init_params(k_param2, D2)

    out2 = concat_seg_head(emb2, prob2, params2, tl=128)
    out2 = jax.block_until_ready(out2)
    ref2 = reference(emb2, prob2, params2)
    assert out2.shape == (B2, L2)
    assert jnp.allclose(out2, ref2, atol=3e-2, rtol=3e-2), \
        float(jnp.max(jnp.abs(out2 - ref2)))

    print("KERNEL_OK")
</pallas_src>

<mosaic_0001>
module attributes {stable_mosaic.version = 11 : i64} {
  func.func @_head_kernel(%arg0: i32, %arg1: i32, %arg2: memref<1x8x32xf32, #tpu.memory_space<vmem>>, %arg3: memref<1x1x256xf32, #tpu.memory_space<vmem>>, %arg4: memref<32x256xbf16, #tpu.memory_space<vmem>>, %arg5: memref<256x128xbf16, #tpu.memory_space<vmem>>, %arg6: memref<1x128xf32, #tpu.memory_space<vmem>>, %arg7: memref<1x128xbf16, #tpu.memory_space<vmem>>, %arg8: memref<1x1xf32, #tpu.memory_space<vmem>>, %arg9: memref<1x1x1x8xf32, #tpu.memory_space<vmem>>) attributes {dimension_semantics = [#tpu.dimension_semantics<parallel>, #tpu.dimension_semantics<parallel>], iteration_bounds = array<i64: 2, 1>, scalar_prefetch = 0 : i64, scratch_operands = 0 : i64, tpu.core_type = #tpu.core_type<tc>, window_params = [{transform_indices = @transform_0, window_bounds = array<i64: 1, 8, 32>}, {transform_indices = @transform_1, window_bounds = array<i64: 1, 1, 256>}, {pipeline_mode = #tpu.pipeline_mode<synchronous>, transform_indices = @transform_2, window_bounds = array<i64: 32, 256>}, {pipeline_mode = #tpu.pipeline_mode<synchronous>, transform_indices = @transform_3, window_bounds = array<i64: 256, 128>}, {pipeline_mode = #tpu.pipeline_mode<synchronous>, transform_indices = @transform_4, window_bounds = array<i64: 1, 128>}, {pipeline_mode = #tpu.pipeline_mode<synchronous>, transform_indices = @transform_5, window_bounds = array<i64: 1, 128>}, {pipeline_mode = #tpu.pipeline_mode<synchronous>, transform_indices = @transform_6, window_bounds = array<i64: 1, 1>}, {transform_indices = @transform_7, window_bounds = array<i64: 1, 1, 1, 8>}]} {
    %c0 = arith.constant 0 : index
    %c0_0 = arith.constant 0 : index
    %c0_1 = arith.constant 0 : index
    %0 = vector.load %arg2[%c0, %c0_0, %c0_1] : memref<1x8x32xf32, #tpu.memory_space<vmem>>, vector<1x8x32xf32>
    %1 = vector.shape_cast %0 : vector<1x8x32xf32> to vector<8x32xf32>
    %2 = arith.truncf %1 : vector<8x32xf32> to vector<8x32xbf16>
    %c0_2 = arith.constant 0 : index
    %c0_3 = arith.constant 0 : index
    %3 = vector.load %arg4[%c0_2, %c0_3] : memref<32x256xbf16, #tpu.memory_space<vmem>>, vector<32x256xbf16>
    %cst = arith.constant dense<0.000000e+00> : vector<8x256xf32>
    %4 = tpu.matmul %2, %3, %cst {dimension_numbers = #tpu.dot_dimension_numbers<[1], [0], [0], [1], [0, 0, 1, 1], [], []>} : vector<8x32xbf16>, vector<32x256xbf16>, vector<8x256xf32> -> vector<8x256xf32>
    %c0_4 = arith.constant 0 : index
    %c0_5 = arith.constant 0 : index
    %c0_6 = arith.constant 0 : index
    %5 = vector.load %arg3[%c0_4, %c0_5, %c0_6] : memref<1x1x256xf32, #tpu.memory_space<vmem>>, vector<1x1x256xf32>
    %6 = vector.shape_cast %5 : vector<1x1x256xf32> to vector<1x256xf32>
    %7 = vector.broadcast %6 : vector<1x256xf32> to vector<8x256xf32>
    %8 = arith.addf %4, %7 : vector<8x256xf32>
    %cst_7 = arith.constant 0.000000e+00 : f32
    %9 = vector.broadcast %cst_7 : f32 to vector<8x256xf32>
    %10 = arith.maximumf %8, %9 : vector<8x256xf32>
    %11 = arith.truncf %10 : vector<8x256xf32> to vector<8x256xbf16>
    %c0_8 = arith.constant 0 : index
    %c0_9 = arith.constant 0 : index
    %12 = vector.load %arg5[%c0_8, %c0_9] : memref<256x128xbf16, #tpu.memory_space<vmem>>, vector<256x128xbf16>
    %cst_10 = arith.constant dense<0.000000e+00> : vector<8x128xf32>
    %13 = tpu.matmul %11, %12, %cst_10 {dimension_numbers = #tpu.dot_dimension_numbers<[1], [0], [0], [1], [0, 0, 1, 1], [], []>} : vector<8x256xbf16>, vector<256x128xbf16>, vector<8x128xf32> -> vector<8x128xf32>
    %c0_11 = arith.constant 0 : index
    %c0_12 = arith.constant 0 : index
    %14 = vector.load %arg6[%c0_11, %c0_12] : memref<1x128xf32, #tpu.memory_space<vmem>>, vector<1x128xf32>
    %15 = vector.broadcast %14 : vector<1x128xf32> to vector<8x128xf32>
    %16 = arith.addf %13, %15 : vector<8x128xf32>
    %cst_13 = arith.constant 0.000000e+00 : f32
    %17 = vector.broadcast %cst_13 : f32 to vector<8x128xf32>
    %18 = arith.maximumf %16, %17 : vector<8x128xf32>
    %c0_14 = arith.constant 0 : index
    %c0_15 = arith.constant 0 : index
    %19 = vector.load %arg7[%c0_14, %c0_15] : memref<1x128xbf16, #tpu.memory_space<vmem>>, vector<1x128xbf16>
    %20 = arith.truncf %18 : vector<8x128xf32> to vector<8x128xbf16>
    %cst_16 = arith.constant dense<0.000000e+00> : vector<1x8xf32>
    %21 = tpu.matmul %19, %20, %cst_16 {dimension_numbers = #tpu.dot_dimension_numbers<[1], [1], [0], [0], [0, 0, 1, 0], [], []>} : vector<1x128xbf16>, vector<8x128xbf16>, vector<1x8xf32> -> vector<1x8xf32>
    %c0_17 = arith.constant 0 : index
    %c0_18 = arith.constant 0 : index
    %22 = vector.load %arg8[%c0_17, %c0_18] : memref<1x1xf32, #tpu.memory_space<vmem>>, vector<1x1xf32>
    %23 = vector.broadcast %22 : vector<1x1xf32> to vector<1x8xf32>
    %24 = arith.addf %21, %23 : vector<1x8xf32>
    %c0_19 = arith.constant 0 : index
    %c0_20 = arith.constant 0 : index
    %c0_21 = arith.constant 0 : index
    %c0_22 = arith.constant 0 : index
    %25 = vector.load %arg9[%c0_19, %c0_20, %c0_21, %c0_22] : memref<1x1x1x8xf32, #tpu.memory_space<vmem>>, vector<1x1x1x8xf32>
    %26 = vector.shape_cast %25 : vector<1x1x1x8xf32> to vector<1x8xf32>
    %27 = vector.shape_cast %24 : vector<1x8xf32> to vector<1x1x1x8xf32>
    tpu.vector_store %arg9[%c0_19, %c0_20, %c0_21, %c0_22], %27 {strides = array<i32>} : memref<1x1x1x8xf32, #tpu.memory_space<vmem>>, vector<1x1x1x8xf32>,
    return
  }
  func.func @transform_0(%arg0: i32, %arg1: i32) -> (i32, i32, i32) {
    %c0_i32 = arith.constant 0 : i32
    %c0_i32_0 = arith.constant 0 : i32
    return %arg0, %arg1, %c0_i32 : i32, i32, i32
  }
  func.func @transform_1(%arg0: i32, %arg1: i32) -> (i32, i32, i32) {
    %c0_i32 = arith.constant 0 : i32
    %c0_i32_0 = arith.constant 0 : i32
    %c0_i32_1 = arith.constant 0 : i32
    return %arg0, %c0_i32, %c0_i32_0 : i32, i32, i32
  }
  func.func @transform_2(%arg0: i32, %arg1: i32) -> (i32, i32) {
    %c0_i32 = arith.constant 0 : i32
    %c0_i32_0 = arith.constant 0 : i32
    %c0_i32_1 = arith.constant 0 : i32
    return %c0_i32, %c0_i32_0 : i32, i32
  }
  func.func @transform_3(%arg0: i32, %arg1: i32) -> (i32, i32) {
    %c0_i32 = arith.constant 0 : i32
    %c0_i32_0 = arith.constant 0 : i32
    %c0_i32_1 = arith.constant 0 : i32
    return %c0_i32, %c0_i32_0 : i32, i32
  }
  func.func @transform_4(%arg0: i32, %arg1: i32) -> (i32, i32) {
    %c0_i32 = arith.constant 0 : i32
    %c0_i32_0 = arith.constant 0 : i32
    %c0_i32_1 = arith.constant 0 : i32
    return %c0_i32, %c0_i32_0 : i32, i32
  }
  func.func @transform_5(%arg0: i32, %arg1: i32) -> (i32, i32) {
    %c0_i32 = arith.constant 0 : i32
    %c0_i32_0 = arith.constant 0 : i32
    %c0_i32_1 = arith.constant 0 : i32
    return %c0_i32, %c0_i32_0 : i32, i32
  }
  func.func @transform_6(%arg0: i32, %arg1: i32) -> (i32, i32) {
    %c0_i32 = arith.constant 0 : i32
    %c0_i32_0 = arith.constant 0 : i32
    %c0_i32_1 = arith.constant 0 : i32
    return %c0_i32, %c0_i32_0 : i32, i32
  }
  func.func @transform_7(%arg0: i32, %arg1: i32) -> (i32, i32, i32, i32) {
    %c0_i32 = arith.constant 0 : i32
    %c0_i32_0 = arith.constant 0 : i32
    %c0_i32_1 = arith.constant 0 : i32
    return %arg0, %arg1, %c0_i32, %c0_i32_0 : i32, i32, i32, i32
  }
}

</mosaic_0001>

<llo_original>
// kernel: concat_seg_head.1
$region0: #{concat_seg_head.1}
  #allocation0 [shape = 'u32[]', space=smem, size = 0x4, offset = 0x4, fixed_abs, tag = 'smem constant byte address 0x4 - core index']
  #allocation1 [shape = 'u32[144,128]{1,0:T(1,128)}', space=vmem, size = 0x12000, scoped, tag = 'internal scratch']
  #allocation2 [shape = 'f32[1,1]{1,0:T(1,128)S(1)}', space=vmem, size = 0x200, scoped, tag = 'scoped memory for concat_seg_head.1']
  %s0 = inlined_call_operand.vmem [shape: f32[2,8,32], index: 0, kind: input, shape index: {}]
  %s1 = inlined_call_operand.vmem [shape: f32[2,1,256], index: 1, kind: input, shape index: {}]
  %s2 = inlined_call_operand.vmem [shape: bf16[32,256], index: 2, kind: input, shape index: {}]
  %s3 = inlined_call_operand.vmem [shape: bf16[256,128], index: 3, kind: input, shape index: {}]
  %s4 = inlined_call_operand.vmem [shape: f32[1,128], index: 4, kind: input, shape index: {}]
  %s5 = inlined_call_operand.vmem [shape: bf16[1,128], index: 5, kind: input, shape index: {}]
  %s6 = inlined_call_operand.<no memory space> [shape: f32[1,1], index: 6, kind: input, shape index: {}]
  %s7 = inlined_call_operand.hbm [shape: f32[2,1,1,8], index: 7, kind: output, shape index: {}]
  %s8 = sld [smem:[#allocation0]]
  $region61: #{concat_seg_head.1} parent=0
    _
  %s10 = ssub.s32 1, %s8
  %s11 = scalar_select 0, %s10, %s8
  %v12 = vstv %s6
  %13 = vst [vmem:[#allocation2] sm:$0x1] %v12
  $region1: #{concat_seg_head.1} parent=0
    #allocation3 [shape = 'u8[1024]{0}', space=vmem, size = 0x400, scoped, tag = 'output window, operand 0']
    #allocation4 [shape = 's32[2]{0}', space=sflag, size = 0x8, scoped, tag = 'scoped memory for concat_seg_head.1']
    %14 = vsyncpa [#allocation4], 0
    %s15 = scalar_lea.sflag [#allocation4], 1
    %16 = vsyncpa %s15, 0
    loop: start=0, step=1, limit=4
    $region2: #{concat_seg_head.1} parent=1 // loop_pre_header
      _
    $region3: #{concat_seg_head.1} parent=1 // loop_header
      %s18 = sphi 0, %s22
      %p19 = scmp.ge.s32.totalorder %s18, 4
      %s25 = sphi 0, %s37
      %s26 = sphi 0, %s33
      %s27 = sphi 0, %s25
      %s28 = sphi 0, %s26
      %s29 = sphi 0, %s27
      %s30 = sphi 0, %s28
      %s42 = sphi 0, %s44
      %s45 = sphi 0, %s42
      %s46 = sphi 0, %s45
      %s62 = sphi 0, %s46
      %s68 = sphi 0, %s70
      %s71 = sphi 0, %s68
      %s72 = sphi 0, %s71
      %s88 = sphi 0, %s72
      %s92 = sphi 0, %s92
      %s94 = sphi 0, %s92
      %s95 = sphi 0, %s94
      %s109 = sphi 0, %s95
      %s113 = sphi 0, %s113
      %s115 = sphi 0, %s113
      %s116 = sphi 0, %s115
      %s130 = sphi 0, %s116
      %s134 = sphi 0, %s134
      %s136 = sphi 0, %s134
      %s137 = sphi 0, %s136
      %s151 = sphi 0, %s137
      %s155 = sphi 0, %s155
      %s157 = sphi 0, %s155
      %s158 = sphi 0, %s157
      %s172 = sphi 0, %s158
      %s176 = sphi 0, %s176
      %s178 = sphi 0, %s176
      %s179 = sphi 0, %s178
      %s193 = sphi 0, %s179
      %s201 = sphi 0, %s203
      %s204 = sphi 0, %s201
      %s205 = sphi 0, %s204
      %s221 = sphi 0, %s205
    $region4: #{concat_seg_head.1} parent=1 // loop_header_branch
      %21 = sbr.rel (%p19) target = $region8
    $region5: #{concat_seg_head.1} parent=1 // loop_body
      %s23 = ssub.s32 %s18, 1
      %s24 = ssub.s32 %s18, 2
      %s31 = sadd.s32 1, %s26
      %p32 = scmp.ge.s32.totalorder %s31, 1
      %s33 = scalar_select %p32, 0, %s31
      %s34 = sadd.s32 1, %s25
      %s35 = scalar_select %p32, %s34, %s25
      %p36 = scmp.ge.s32.totalorder %s35, 2
      %s37 = scalar_select %p36, 0, %s35
      %s38 = ssub.s32 %s25, %s37
      %s39 = ssub.s32 %s26, %s33
      %s40 = sor.u32 %s38, %s39
      %p41 = scmp.eq.s32.totalorder %s40, 0
      %s43 = sadd.s32 %s42, 1
      %s44 = scalar_select %p41, %s42, %s43
      %p47 = pneg %p41
      %p48 = scmp.eq.s32.totalorder %s18, 1
      %p49 = por %p47, %p48
      %p50 = scmp.ne.s32.totalorder %s42, %s45
      %p51 = scmp.eq.s32.totalorder %s18, 0
      %p52 = por %p50, %p51
      %p53 = scmp.ne.s32.totalorder %s42, %s45
      %p54 = scmp.eq.s32.totalorder %s23, 1
      %p55 = por %p53, %p54
      %p56 = scmp.ne.s32.totalorder %s45, %s46
      %p57 = scmp.eq.s32.totalorder %s23, 0
      %p58 = por %p56, %p57
      %p59 = scmp.ne.s32.totalorder %s45, %s46
      %p60 = scmp.eq.s32.totalorder %s24, 1
      %p61 = por %p59, %p60
      %p63 = scmp.ne.s32.totalorder %s46, %s62
      %p64 = scmp.eq.s32.totalorder %s24, 0
      %p65 = por %p63, %p64
      %s66 = ssub.s32 %s25, %s37
      %p67 = scmp.eq.s32.totalorder %s66, 0
      %s69 = sadd.s32 %s68, 1
      %s70 = scalar_select %p67, %s68, %s69
      %p73 = pneg %p67
      %p74 = scmp.eq.s32.totalorder %s18, 1
      %p75 = por %p73, %p74
      %p76 = scmp.ne.s32.totalorder %s68, %s71
      %p77 = scmp.eq.s32.totalorder %s18, 0
      %p78 = por %p76, %p77
      %p79 = scmp.ne.s32.totalorder %s68, %s71
      %p80 = scmp.eq.s32.totalorder %s23, 1
      %p81 = por %p79, %p80
      %p82 = scmp.ne.s32.totalorder %s71, %s72
      %p83 = scmp.eq.s32.totalorder %s23, 0
      %p84 = por %p82, %p83
      %p85 = scmp.ne.s32.totalorder %s71, %s72
      %p86 = scmp.eq.s32.totalorder %s24, 1
      %p87 = por %p85, %p86
      %p89 = scmp.ne.s32.totalorder %s72, %s88
      %p90 = scmp.eq.s32.totalorder %s24, 0
      %p91 = por %p89, %p90
      %s93 = sadd.s32 %s92, 1
      %p96 = scmp.eq.s32.totalorder %s18, 1
      %p97 = scmp.ne.s32.totalorder %s92, %s94
      %p98 = scmp.eq.s32.totalorder %s18, 0
      %p99 = por %p97, %p98
      %p100 = scmp.ne.s32.totalorder %s92, %s94
      %p101 = scmp.eq.s32.totalorder %s23, 1
      %p102 = por %p100, %p101
      %p103 = scmp.ne.s32.totalorder %s94, %s95
      %p104 = scmp.eq.s32.totalorder %s23, 0
      %p105 = por %p103, %p104
      %p106 = scmp.ne.s32.totalorder %s94, %s95
      %p107 = scmp.eq.s32.totalorder %s24, 1
      %p108 = por %p106, %p107
      %p110 = scmp.ne.s32.totalorder %s95, %s109
      %p111 = scmp.eq.s32.totalorder %s24, 0
      %p112 = por %p110, %p111
      %s114 = sadd.s32 %s113, 1
      %p117 = scmp.eq.s32.totalorder %s18, 1
      %p118 = scmp.ne.s32.totalorder %s113, %s115
      %p119 = scmp.eq.s32.totalorder %s18, 0
      %p120 = por %p118, %p119
      %p121 = scmp.ne.s32.totalorder %s113, %s115
      %p122 = scmp.eq.s32.totalorder %s23, 1
      %p123 = por %p121, %p122
      %p124 = scmp.ne.s32.totalorder %s115, %s116
      %p125 = scmp.eq.s32.totalorder %s23, 0
      %p126 = por %p124, %p125
      %p127 = scmp.ne.s32.totalorder %s115, %s116
      %p128 = scmp.eq.s32.totalorder %s24, 1
      %p129 = por %p127, %p128
      %p131 = scmp.ne.s32.totalorder %s116, %s130
      %p132 = scmp.eq.s32.totalorder %s24, 0
      %p133 = por %p131, %p132
      %s135 = sadd.s32 %s134, 1
      %p138 = scmp.eq.s32.totalorder %s18, 1
      %p139 = scmp.ne.s32.totalorder %s134, %s136
      %p140 = scmp.eq.s32.totalorder %s18, 0
      %p141 = por %p139, %p140
      %p142 = scmp.ne.s32.totalorder %s134, %s136
      %p143 = scmp.eq.s32.totalorder %s23, 1
      %p144 = por %p142, %p143
      %p145 = scmp.ne.s32.totalorder %s136, %s137
      %p146 = scmp.eq.s32.totalorder %s23, 0
      %p147 = por %p145, %p146
      %p148 = scmp.ne.s32.totalorder %s136, %s137
      %p149 = scmp.eq.s32.totalorder %s24, 1
      %p150 = por %p148, %p149
      %p152 = scmp.ne.s32.totalorder %s137, %s151
      %p153 = scmp.eq.s32.totalorder %s24, 0
      %p154 = por %p152, %p153
      %s156 = sadd.s32 %s155, 1
      %p159 = scmp.eq.s32.totalorder %s18, 1
      %p160 = scmp.ne.s32.totalorder %s155, %s157
      %p161 = scmp.eq.s32.totalorder %s18, 0
      %p162 = por %p160, %p161
      %p163 = scmp.ne.s32.totalorder %s155, %s157
      %p164 = scmp.eq.s32.totalorder %s23, 1
      %p165 = por %p163, %p164
      %p166 = scmp.ne.s32.totalorder %s157, %s158
      %p167 = scmp.eq.s32.totalorder %s23, 0
      %p168 = por %p166, %p167
      %p169 = scmp.ne.s32.totalorder %s157, %s158
      %p170 = scmp.eq.s32.totalorder %s24, 1
      %p171 = por %p169, %p170
      %p173 = scmp.ne.s32.totalorder %s158, %s172
      %p174 = scmp.eq.s32.totalorder %s24, 0
      %p175 = por %p173, %p174
      %s177 = sadd.s32 %s176, 1
      %p180 = scmp.eq.s32.totalorder %s18, 1
      %p181 = scmp.ne.s32.totalorder %s176, %s178
      %p182 = scmp.eq.s32.totalorder %s18, 0
      %p183 = por %p181, %p182
      %p184 = scmp.ne.s32.totalorder %s176, %s178
      %p185 = scmp.eq.s32.totalorder %s23, 1
      %p186 = por %p184, %p185
      %p187 = scmp.ne.s32.totalorder %s178, %s179
      %p188 = scmp.eq.s32.totalorder %s23, 0
      %p189 = por %p187, %p188
      %p190 = scmp.ne.s32.totalorder %s178, %s179
      %p191 = scmp.eq.s32.totalorder %s24, 1
      %p192 = por %p190, %p191
      %p194 = scmp.ne.s32.totalorder %s179, %s193
      %p195 = scmp.eq.s32.totalorder %s24, 0
      %p196 = por %p194, %p195
      %s197 = ssub.s32 %s25, %s37
      %s198 = ssub.s32 %s26, %s33
      %s199 = sor.u32 %s197, %s198
      %p200 = scmp.eq.s32.totalorder %s199, 0
      %s202 = sadd.s32 %s201, 1
      %s203 = scalar_select %p200, %s201, %s202
      %p206 = pneg %p200
      %p207 = scmp.eq.s32.totalorder %s18, 1
      %p208 = por %p206, %p207
      %p209 = scmp.ne.s32.totalorder %s201, %s204
      %p210 = scmp.eq.s32.totalorder %s18, 0
      %p211 = por %p209, %p210
      %p212 = scmp.ne.s32.totalorder %s201, %s204
      %p213 = scmp.eq.s32.totalorder %s23, 1
      %p214 = por %p212, %p213
      %p215 = scmp.ne.s32.totalorder %s204, %s205
      %p216 = scmp.eq.s32.totalorder %s23, 0
      %p217 = por %p215, %p216
      %p218 = scmp.ne.s32.totalorder %s204, %s205
      %p219 = scmp.eq.s32.totalorder %s24, 1
      %p220 = por %p218, %p219
      %p222 = scmp.ne.s32.totalorder %s205, %s221
      %p223 = scmp.eq.s32.totalorder %s24, 0
      %p224 = por %p222, %p223
      %p225 = scmp.le.s32.totalorder 1, %s18
      %p226 = scmp.lt.s32.totalorder %s18, 3
      %p227 = pnand %p225, %p226
      %p228 = pneg %p227
      // Predicated region
      $region9: #{concat_seg_head.1} parent=5 // pred_check
        _
      $region10: #{concat_seg_head.1} parent=5 // pred_check_branch
        %230 = sbr.rel (%p227) target = $region12
      $region11: #{concat_seg_head.1} parent=5 // pred_region
        %s231 = ssub.s32 %s18, 1
        // Predicated region
        $region13: #{concat_seg_head.1} parent=11 // pred_check
          %p232 = pneg %p105
        $region14: #{concat_seg_head.1} parent=11 // pred_check_branch
          %234 = sbr.rel (%p232) target = $region16
        $region15: #{concat_seg_head.1} parent=11 // pred_region
          _
        $region16: #{concat_seg_head.1} parent=11 // pred_fallthru
          _
        // Predicated region
        $region17: #{concat_seg_head.1} parent=11 // pred_check
          %p235 = pneg %p126
        $region18: #{concat_seg_head.1} parent=11 // pred_check_branch
          %237 = sbr.rel (%p235) target = $region20
        $region19: #{concat_seg_head.1} parent=11 // pred_region
          _
        $region20: #{concat_seg_head.1} parent=11 // pred_fallthru
          _
        // Predicated region
        $region21: #{concat_seg_head.1} parent=11 // pred_check
          %p238 = pneg %p147
        $region22: #{concat_seg_head.1} parent=11 // pred_check_branch
          %240 = sbr.rel (%p238) target = $region24
        $region23: #{concat_seg_head.1} parent=11 // pred_region
          _
        $region24: #{concat_seg_head.1} parent=11 // pred_fallthru
          _
        // Predicated region
        $region25: #{concat_seg_head.1} parent=11 // pred_check
          %p241 = pneg %p168
        $region26: #{concat_seg_head.1} parent=11 // pred_check_branch
          %243 = sbr.rel (%p241) target = $region28
        $region27: #{concat_seg_head.1} parent=11 // pred_region
          _
        $region28: #{concat_seg_head.1} parent=11 // pred_fallthru
          _
        // Predicated region
        $region29: #{concat_seg_head.1} parent=11 // pred_check
          %p244 = pneg %p189
        $region30: #{concat_seg_head.1} parent=11 // pred_check_branch
          %246 = sbr.rel (%p244) target = $region32
        $region31: #{concat_seg_head.1} parent=11 // pred_region
          _
        $region32: #{concat_seg_head.1} parent=11 // pred_fallthru
          _
      $region12: #{concat_seg_head.1} parent=5 // pred_fallthru
        _
      %p247 = scmp.lt.s32.totalorder %s18, 2
      // Predicated region
      $region33: #{concat_seg_head.1} parent=5 // pred_check
        %p248 = pneg %p247
      $region34: #{concat_seg_head.1} parent=5 // pred_check_branch
        %250 = sbr.rel (%p248) target = $region36
      $region35: #{concat_seg_head.1} parent=5 // pred_region
        // Predicated region
        $region37: #{concat_seg_head.1} parent=35 // pred_check
          %p251 = pneg %p52
        $region38: #{concat_seg_head.1} parent=35 // pred_check_branch
          %253 = sbr.rel (%p251) target = $region40
        $region39: #{concat_seg_head.1} parent=35 // pred_region
          %p254 = scmp.lt.s32.totalorder %s25, 1
          %s255 = scalar_select %p254, %s25, 1
          %p256 = scmp.lt.s32.totalorder %s26, 0
          %s257 = scalar_select %p256, %s26, 0
          %s258 = sadd.s32 %s257, %s255
          %s259 = smul.addr %s258, 8
          %s260 = scalar_lea.vmem %s0, %s259
        $region40: #{concat_seg_head.1} parent=35 // pred_fallthru
          _
        // Predicated region
        $region41: #{concat_seg_head.1} parent=35 // pred_check
          %p261 = pneg %p78
        $region42: #{concat_seg_head.1} parent=35 // pred_check_branch
          %263 = sbr.rel (%p261) target = $region44
        $region43: #{concat_seg_head.1} parent=35 // pred_region
          %p264 = scmp.lt.s32.totalorder %s25, 1
          %s265 = scalar_select %p264, %s25, 1
          %s266 = smul.addr %s265, 2
          %s267 = scalar_lea.vmem %s1, %s266
        $region44: #{concat_seg_head.1} parent=35 // pred_fallthru
          _
      $region36: #{concat_seg_head.1} parent=5 // pred_fallthru
        _
      %p268 = scmp.le.s32.totalorder 1, %s18
      %p269 = scmp.lt.s32.totalorder %s18, 3
      %p270 = pnand %p268, %p269
      %p271 = pneg %p270
      // Predicated region
      $region45: #{concat_seg_head.1} parent=5 // pred_check
        _
      $region46: #{concat_seg_head.1} parent=5 // pred_check_branch
        %273 = sbr.rel (%p270) target = $region48
      $region47: #{concat_seg_head.1} parent=5 // pred_region
        %s274 = ssub.s32 %s18, 1
        %p275 = scmp.lt.s32.totalorder %s27, 1
        %s276 = scalar_select %p275, %s27, 1
        %p277 = scmp.lt.s32.totalorder %s28, 0
        %s278 = scalar_select %p277, %s28, 0
        %s279 = sadd.s32 %s278, %s276
        %s280 = smul.addr %s279, 8
        %s281 = scalar_lea.vmem %s0, %s280
        %p282 = pneg %p58
        %p283 = pneg %p55
        %p284 = scmp.lt.s32.totalorder %s27, 1
        %s285 = scalar_select %p284, %s27, 1
        %s286 = smul.addr %s285, 2
        %s287 = scalar_lea.vmem %s1, %s286
        %p288 = pneg %p84
        %p289 = pneg %p81
        %p290 = pneg %p105
        %p291 = pneg %p102
        %p292 = pneg %p126
        %p293 = pneg %p123
        %p294 = pneg %p147
        %p295 = pneg %p144
        %p296 = pneg %p168
        %p297 = pneg %p165
        %p298 = pneg %p189
        %p299 = pneg %p186
        %p300 = pneg %p217
        %p301 = pneg %p214
        %s302 = sand.u32 %s204, 1
        %s303 = scalar_lea.sflag [#allocation4], %s302
        %s304 = sand.u32 %s204, 1
        %s305 = scalar_lea.vmem [#allocation3], %s304
        %p306 = scmp.lt.s32.totalorder %s27, 1
        %s307 = scalar_select %p306, %s27, 1
        %p308 = scmp.lt.s32.totalorder %s28, 0
        %s309 = scalar_select %p308, %s28, 0
        %s310 = sadd.s32 %s309, %s307
        %s311 = smul.addr %s310, 8
        %s312 = scalar_lea.vmem %s0, %s311
        %p313 = scmp.lt.s32.totalorder %s27, 1
        %s314 = scalar_select %p313, %s27, 1
        %s315 = smul.addr %s314, 2
        %s316 = scalar_lea.vmem %s1, %s315
        %v318 = vld [vmem:[%s312] sm:$0xff]
        %v319 = vpack.c.bf16 %v318, %v318
        %v320 = vld [vmem:[%s2] sm:$0xff]
        %v321 = vld [vmem:[%s2 + $0x8] sm:$0xff]
        %v322 = vld [vmem:[%s2 + $0x10] sm:$0xff]
        %v323 = vld [vmem:[%s2 + $0x18] sm:$0xff]
        %v324 = vld [vmem:[%s316] sm:$0x3]
        %v326 = vlaneseq
        %v327 = vshrl.u32 %v326, 7
        %v328 = vsub.s32 0, %v327
        %v329 = vrot.slane %v324, %v328
        %v330 = vlaneseq
        %v331 = vshrl.u32 %v330, 7
        %v332 = vsub.s32 1, %v331
        %v333 = vrot.slane %v324, %v332
        %v340 = vunpack.c.l.b16 %v320
        %v341 = vunpack.c.h.b16 %v320
        %v342 = vunpack.c.l.b16 %v321
        %v343 = vunpack.c.h.b16 %v321
        %v344 = vunpack.c.l.b16 %v322
        %v345 = vunpack.c.h.b16 %v322
        %v346 = vunpack.c.l.b16 %v323
        %v347 = vunpack.c.h.b16 %v323
        %v348 = vpack.c.b16 %v342, %v340
        %v349 = vpack.c.b16 %v343, %v341
        %v350 = vpack.c.b16 %v346, %v344
        %v351 = vpack.c.b16 %v347, %v345
        %vm356 = vcmask 261120
        %v358 = vsel %vm356, %v319, 0
        %360 = vmatprep.subr.bf16.mxu0 0
        %361 = vmatpush1.bf16.msra.mxu0 0
        %362 = vmatprep.subr.bf16.mxu0 0
        %363 = vmatpush1.bf16.msra.mxu0 0
        %364 = vmatprep.subr.bf16.mxu0 0
        %365 = vmatpush1.bf16.msra.mxu0 0
        %366 = vmatprep.subr.bf16.mxu0 0
        %367 = vmatpush1.bf16.msra.mxu0 0
        %368 = vmatprep.subr.bf16.mxu0 0
        %369 = vmatpush1.bf16.msra.mxu0 0
        %370 = vmatprep.subr.bf16.mxu0 0
        %371 = vmatpush1.bf16.msra.mxu0 0
        %372 = vmatprep.subr.bf16.mxu0 %v351
        %373 = vmatpush1.bf16.msra.mxu0 %v350
        %374 = vmatprep.subr.bf16.mxu0 %v349
        %375 = vmatpush1.bf16.msra.mxu0 %v348
        %376 = vmatprep.subr.bf16.mxu0 0
        %377 = vmatpush2.bf16.msra.mxu0 0
        %378 = vmatprep.subr.bf16.mxu0 0
        %379 = vmatpush2.bf16.msra.mxu0 0
        %380 = vmatprep.subr.bf16.mxu0 0
        %381 = vmatpush2.bf16.msra.mxu0 0
        %382 = vmatprep.subr.bf16.mxu0 0
        %383 = vmatpush2.bf16.msra.mxu0 0
        %384 = vmatprep.subr.bf16.mxu0 0
        %385 = vmatpush2.bf16.msra.mxu0 0
        %386 = vmatprep.subr.bf16.mxu0 0
        %387 = vmatpush2.bf16.msra.mxu0 0
        %388 = vmatprep.subr.bf16.mxu0 0
        %389 = vmatpush2.bf16.msra.mxu0 0
        %390 = vmatprep.subr.bf16.mxu0 0
        %391 = vmatpush2.bf16.msra.mxu0 0
        %392 = vmatprep.mubr.bf16.mxu0 0
        %393 = vmatmul.mubr.bf16.gmra.mxu0 %v358
        %v394 = vpop.f32.mrf.mxu0
        %v395 = vadd.f32 %v329, %v394
        %v396 = vpop.f32.mrf.mxu0
        %v397 = vadd.f32 %v333, %v396
        %v398 = vpop.f32.mrf.mxu0
        %v399 = vpop.f32.mrf.mxu0
        %400 = vdwg.mxu0
        %v401 = vmax.f32 %v395, 0.0
        %v402 = vmax.f32 %v397, 0.0
        %v403 = vpack.c.bf16 %v401, %v401
        %v404 = vpack.c.bf16 %v402, %v402
        %v405 = vld [vmem:[%s3] sm:$0xf]
        %v406 = vld [vmem:[%s3 + $0x4] sm:$0xf]
        %v407 = vld [vmem:[%s3 + $0x8] sm:$0xf]
        %v408 = vld [vmem:[%s3 + $0xc] sm:$0xf]
        %v409 = vld [vmem:[%s3 + $0x10] sm:$0xf]
        %v410 = vld [vmem:[%s3 + $0x14] sm:$0xf]
        %v411 = vld [vmem:[%s3 + $0x18] sm:$0xf]
        %v412 = vld [vmem:[%s3 + $0x1c] sm:$0xf]
        %v413 = vld [vmem:[%s3 + $0x20] sm:$0xf]
        %v414 = vld [vmem:[%s3 + $0x24] sm:$0xf]
        %v415 = vld [vmem:[%s3 + $0x28] sm:$0xf]
        %v416 = vld [vmem:[%s3 + $0x2c] sm:$0xf]
        %v417 = vld [vmem:[%s3 + $0x30] sm:$0xf]
        %v418 = vld [vmem:[%s3 + $0x34] sm:$0xf]
        %v419 = vld [vmem:[%s3 + $0x38] sm:$0xf]
        %v420 = vld [vmem:[%s3 + $0x3c] sm:$0xf]
        %v421 = vld [vmem:[%s3 + $0x40] sm:$0xf]
        %v422 = vld [vmem:[%s3 + $0x44] sm:$0xf]
        %v423 = vld [vmem:[%s3 + $0x48] sm:$0xf]
        %v424 = vld [vmem:[%s3 + $0x4c] sm:$0xf]
        %v425 = vld [vmem:[%s3 + $0x50] sm:$0xf]
        %v426 = vld [vmem:[%s3 + $0x54] sm:$0xf]
        %v427 = vld [vmem:[%s3 + $0x58] sm:$0xf]
        %v428 = vld [vmem:[%s3 + $0x5c] sm:$0xf]
        %v429 = vld [vmem:[%s3 + $0x60] sm:$0xf]
        %v430 = vld [vmem:[%s3 + $0x64] sm:$0xf]
        %v431 = vld [vmem:[%s3 + $0x68] sm:$0xf]
        %v432 = vld [vmem:[%s3 + $0x6c] sm:$0xf]
        %v433 = vld [vmem:[%s3 + $0x70] sm:$0xf]
        %v434 = vld [vmem:[%s3 + $0x74] sm:$0xf]
        %v435 = vld [vmem:[%s3 + $0x78] sm:$0xf]
        %v436 = vld [vmem:[%s3 + $0x7c] sm:$0xf]
        %v437 = vld [vmem:[%s4] sm:$0x1]
        %v439 = vlaneseq
        %v440 = vshrl.u32 %v439, 7
        %v441 = vsub.s32 0, %v440
        %v442 = vrot.slane %v437, %v441
        %v476 = vunpack.c.l.b16 %v405
        %v477 = vunpack.c.l.b16 %v406
        %v478 = vunpack.c.l.b16 %v407
        %v479 = vunpack.c.l.b16 %v408
        %v480 = vunpack.c.l.b16 %v409
        %v481 = vunpack.c.l.b16 %v410
        %v482 = vunpack.c.l.b16 %v411
        %v483 = vunpack.c.l.b16 %v412
        %v484 = vunpack.c.l.b16 %v413
        %v485 = vunpack.c.l.b16 %v414
        %v486 = vunpack.c.l.b16 %v415
        %v487 = vunpack.c.l.b16 %v416
        %v488 = vunpack.c.l.b16 %v417
        %v489 = vunpack.c.l.b16 %v418
        %v490 = vunpack.c.l.b16 %v419
        %v491 = vunpack.c.l.b16 %v420
        %v492 = vunpack.c.l.b16 %v421
        %v493 = vunpack.c.l.b16 %v422
        %v494 = vunpack.c.l.b16 %v423
        %v495 = vunpack.c.l.b16 %v424
        %v496 = vunpack.c.l.b16 %v425
        %v497 = vunpack.c.l.b16 %v426
        %v498 = vunpack.c.l.b16 %v427
        %v499 = vunpack.c.l.b16 %v428
        %v500 = vunpack.c.l.b16 %v429
        %v501 = vunpack.c.l.b16 %v430
        %v502 = vunpack.c.l.b16 %v431
        %v503 = vunpack.c.l.b16 %v432
        %v504 = vunpack.c.l.b16 %v433
        %v505 = vunpack.c.l.b16 %v434
        %v506 = vunpack.c.l.b16 %v435
        %v507 = vunpack.c.l.b16 %v436
        %v508 = vpack.c.b16 %v477, %v476
        %v509 = vpack.c.b16 %v479, %v478
        %v510 = vpack.c.b16 %v481, %v480
        %v511 = vpack.c.b16 %v483, %v482
        %v512 = vpack.c.b16 %v485, %v484
        %v513 = vpack.c.b16 %v487, %v486
        %v514 = vpack.c.b16 %v489, %v488
        %v515 = vpack.c.b16 %v491, %v490
        %v516 = vpack.c.b16 %v493, %v492
        %v517 = vpack.c.b16 %v495, %v494
        %v518 = vpack.c.b16 %v497, %v496
        %v519 = vpack.c.b16 %v499, %v498
        %v520 = vpack.c.b16 %v501, %v500
        %v521 = vpack.c.b16 %v503, %v502
        %v522 = vpack.c.b16 %v505, %v504
        %v523 = vpack.c.b16 %v507, %v506
        %540 = vmatprep.subr.bf16.mxu0 0
        %541 = vmatpush1.bf16.msra.mxu0 %v515
        %542 = vmatprep.subr.bf16.mxu0 0
        %543 = vmatpush1.bf16.msra.mxu0 %v514
        %544 = vmatprep.subr.bf16.mxu0 0
        %545 = vmatpush1.bf16.msra.mxu0 %v513
        %546 = vmatprep.subr.bf16.mxu0 0
        %547 = vmatpush1.bf16.msra.mxu0 %v512
        %548 = vmatprep.subr.bf16.mxu0 0
        %549 = vmatpush1.bf16.msra.mxu0 %v511
        %550 = vmatprep.subr.bf16.mxu0 0
        %551 = vmatpush1.bf16.msra.mxu0 %v510
        %552 = vmatprep.subr.bf16.mxu0 0
        %553 = vmatpush1.bf16.msra.mxu0 %v509
        %554 = vmatprep.subr.bf16.mxu0 0
        %555 = vmatpush1.bf16.msra.mxu0 %v508
        %556 = vmatprep.subr.bf16.mxu0 0
        %557 = vmatpush2.bf16.msra.mxu0 %v523
        %558 = vmatprep.subr.bf16.mxu0 0
        %559 = vmatpush2.bf16.msra.mxu0 %v522
        %560 = vmatprep.subr.bf16.mxu0 0
        %561 = vmatpush2.bf16.msra.mxu0 %v521
        %562 = vmatprep.subr.bf16.mxu0 0
        %563 = vmatpush2.bf16.msra.mxu0 %v520
        %564 = vmatprep.subr.bf16.mxu0 0
        %565 = vmatpush2.bf16.msra.mxu0 %v519
        %566 = vmatprep.subr.bf16.mxu0 0
        %567 = vmatpush2.bf16.msra.mxu0 %v518
        %568 = vmatprep.subr.bf16.mxu0 0
        %569 = vmatpush2.bf16.msra.mxu0 %v517
        %570 = vmatprep.subr.bf16.mxu0 0
        %571 = vmatpush2.bf16.msra.mxu0 %v516
        %572 = vmatprep.mubr.bf16.mxu0 %v404
        %573 = vmatmul.mubr.bf16.gmra.mxu0 %v403
        %v574 = vpop.f32.mrf.mxu0
        %v575 = vadd.f32 %v442, %v574
        %v576 = vpop.f32.mrf.mxu0
        %v577 = vpop.f32.mrf.mxu0
        %v578 = vpop.f32.mrf.mxu0
        %579 = vdwg.mxu0
        %v580 = vmax.f32 %v575, 0.0
        %v581 = vld [vmem:[%s5] sm:$0x1]
        %v582 = vpack.c.bf16 %v580, %v580
        %v583 = vld [vmem:[#allocation2] sm:$0x1]
        %585 = vset.pattern.permute.xlu0 0
        %586 = vperm.xlu0 %585, %v583
        %v587 = vpop.permute.xlu0 %586
        %v589 = vlaneseq
        %v590 = vshrl.u32 %v589, 7
        %v591 = vsub.s32 0, %v590
        %v592 = vrot.slane %v587, %v591
        %593 = vmatprep.subr.bf16.mxu0 0
        %594 = vmatpush1.bf16.xpose.msra.mxu0 0
        %595 = vmatprep.subr.bf16.mxu0 0
        %596 = vmatpush1.bf16.xpose.msra.mxu0 0
        %597 = vmatprep.subr.bf16.mxu0 0
        %598 = vmatpush1.bf16.xpose.msra.mxu0 0
        %599 = vmatprep.subr.bf16.mxu0 0
        %600 = vmatpush1.bf16.xpose.msra.mxu0 0
        %601 = vmatprep.subr.bf16.mxu0 0
        %602 = vmatpush1.bf16.xpose.msra.mxu0 0
        %603 = vmatprep.subr.bf16.mxu0 0
        %604 = vmatpush1.bf16.xpose.msra.mxu0 0
        %605 = vmatprep.subr.bf16.mxu0 0
        %606 = vmatpush1.bf16.xpose.msra.mxu0 0
        %607 = vmatprep.subr.bf16.mxu0 0
        %608 = vmatpush1.bf16.xpose.msra.mxu0 %v582
        %609 = vmatprep.subr.bf16.mxu0 0
        %610 = vmatpush2.bf16.xpose.msra.mxu0 0
        %611 = vmatprep.subr.bf16.mxu0 0
        %612 = vmatpush2.bf16.xpose.msra.mxu0 0
        %613 = vmatprep.subr.bf16.mxu0 0
        %614 = vmatpush2.bf16.xpose.msra.mxu0 0
        %615 = vmatprep.subr.bf16.mxu0 0
        %616 = vmatpush2.bf16.xpose.msra.mxu0 0
        %617 = vmatprep.subr.bf16.mxu0 0
        %618 = vmatpush2.bf16.xpose.msra.mxu0 0
        %619 = vmatprep.subr.bf16.mxu0 0
        %620 = vmatpush2.bf16.xpose.msra.mxu0 0
        %621 = vmatprep.subr.bf16.mxu0 0
        %622 = vmatpush2.bf16.xpose.msra.mxu0 0
        %623 = vmatprep.subr.bf16.mxu0 0
        %624 = vmatpush2.bf16.xpose.msra.mxu0 0
        %625 = vmatprep.mubr.bf16.mxu0 0
        %626 = vmatmul.mubr.bf16.gmra.mxu0 %v581
        %v627 = vpop.f32.mrf.mxu0
        %v628 = vadd.f32 %v592, %v627
        %v629 = vpop.f32.mrf.mxu0
        %v630 = vpop.f32.mrf.mxu0
        %v631 = vpop.f32.mrf.mxu0
        %632 = vdwg.mxu0
        %vm633 = vcmask 57344
        %634 = vst.msk [vmem:[%s305] sm:$0x1] %vm633, %v628
        %s635 = sand.u32 %s204, 1
        %s636 = scalar_lea.sflag [#allocation4], %s635
        %s637 = sand.u32 %s204, 1
        %s638 = scalar_lea.vmem [#allocation3], %s637
        // Predicated region
        $region49: #{concat_seg_head.1} parent=47 // pred_check
          %p639 = pneg %p214
        $region50: #{concat_seg_head.1} parent=47 // pred_check_branch
          %641 = sbr.rel (%p639) target = $region52
        $region51: #{concat_seg_head.1} parent=47 // pred_region
          %s643 = ssub.s32 16, 16
          %644 = vsyncadd %s636, %s643
          %s645 = sadd.s32 %s28, %s27
          %s646 = smul.addr %s645, 16
          %s647 = scalar_lea.hbm %s7, %s646
          %s649 = sshll.u32 %s638, 4
          %s650 = int_to_ptr.vmem [resolvable:$true] %s649
          %652 = dma.vmem_to_hbm [thread:$0]  %s650, 16, %s647, %s636
        $region52: #{concat_seg_head.1} parent=47 // pred_fallthru
          _
      $region48: #{concat_seg_head.1} parent=5 // pred_fallthru
        _
      %p653 = scmp.le.s32.totalorder 2, %s18
      // Predicated region
      $region53: #{concat_seg_head.1} parent=5 // pred_check
        %p654 = pneg %p653
      $region54: #{concat_seg_head.1} parent=5 // pred_check_branch
        %656 = sbr.rel (%p654) target = $region56
      $region55: #{concat_seg_head.1} parent=5 // pred_region
        %s657 = ssub.s32 %s18, 2
        // Predicated region
        $region57: #{concat_seg_head.1} parent=55 // pred_check
          %p658 = pneg %p220
        $region58: #{concat_seg_head.1} parent=55 // pred_check_branch
          %660 = sbr.rel (%p658) target = $region60
        $region59: #{concat_seg_head.1} parent=55 // pred_region
          %s661 = sand.u32 %s205, 1
          %s662 = scalar_lea.sflag [#allocation4], %s661
          %s663 = sand.u32 %s205, 1
          %s664 = scalar_lea.vmem [#allocation3], %s663
          %665 = dma.done %s662, 16
        $region60: #{concat_seg_head.1} parent=55 // pred_fallthru
          _
      $region56: #{concat_seg_head.1} parent=5 // pred_fallthru
        _
    $region6: #{concat_seg_head.1} parent=1 // loop_footer
      %s22 = sadd.s32 1, %s18
    $region7: #{concat_seg_head.1} parent=1 // loop_footer_branch
      %17 = sbr.rel target = $region3
    $region8: #{concat_seg_head.1} parent=1 // loop_exit
      _
    %666 = vsyncpa [#allocation4], 1
    %s667 = scalar_lea.sflag [#allocation4], 1
    %668 = vsyncpa %s667, 1

</llo_original>
